<compile_context>
chip_gen: v7x
topology: tpu7x:2x2x1
jax: 0.10.0
libtpu: 0.0.40
codegen_flags: <defaults>
</compile_context>

<pallas_src>
import jax
import jax.numpy as jnp
from jax import lax
from jax.experimental import pallas as pl
from jax.experimental.pallas import tpu as pltpu


def _ber_decoder_kernel(u_ref, vt_ref, b_ref, scale_ref, bias_ref, out_ref):
    # u_ref:     (tn, D)    bf16   row latents
    # vt_ref:    (D, tf)    bf16   feature latents, pre-transposed (F on lanes)
    # b_ref:     (tn, 1)    int32  per-row batch index
    # scale_ref: (NBp, tf)  f32    softplus(scale_lin) table (zero-padded rows)
    # bias_ref:  (NBp, tf)  f32    bias table               (zero-padded rows)
    # out_ref:   (tn, tf)          logits tile (bf16 by default)
    dot = jnp.dot(u_ref[...], vt_ref[...], preferred_element_type=jnp.float32)

    # Batch gather on the MXU: exact 0/1 one-hot rows select table rows.
    tn = b_ref.shape[0]
    nbp = scale_ref.shape[0]
    onehot = (b_ref[...] == lax.broadcasted_iota(jnp.int32, (tn, nbp), 1)
              ).astype(jnp.float32)                                   # (tn, NBp)
    scale = jnp.dot(onehot, scale_ref[...], preferred_element_type=jnp.float32)
    bias_t = jnp.dot(onehot, bias_ref[...], preferred_element_type=jnp.float32)

    # TODO(synk): on v6e/v7x a bf16 epilogue (downcast `dot` before mul/add)
    # would halve the remaining VPU passes; kept f32 for v5e + precision.
    out_ref[...] = (scale * dot + bias_t).astype(out_ref.dtype)


def _round_up(x, m):
    return ((x + m - 1) // m) * m


def _vmem_estimate_bytes(tn, tf, d, nbp, out_itemsize):
    # Double-buffered pipeline blocks (bf16 u/vt, f32 tables, int32 b, output).
    blocks = 2 * (tn * d * 2 + d * tf * 2 + tn * 4
                  + 2 * nbp * tf * 4 + tn * tf * out_itemsize)
    # Generous allowance for in-kernel f32 temporaries (dot / scale / bias / result).
    temps = 4 * tn * tf * 4
    return blocks + temps


def ber_data_decoder_forward(u, v, b, l, scale_lin, bias, *,
                             tn=512, tf=2048, out_dtype=jnp.bfloat16):
    """Returns (logits, adj_rec=None). `l` is unused (matches the PyTorch forward)."""
    del l
    N, D = u.shape
    F = v.shape[0]
    NB = scale_lin.shape[0]

    # Hoisted elementwise work: softplus on the tiny (n_batches, F) table only.
    scale_sp = jax.nn.softplus(scale_lin.astype(jnp.float32))        # (NB, F)
    bias_f32 = bias.astype(jnp.float32)                              # (NB, F)

    # Pad the batch dim of the tables to a multiple of 8 (clean sublane layout,
    # clean K for the one-hot matmul). Padded rows are zero and never selected.
    NB_pad = _round_up(max(NB, 1), 8)
    if NB_pad != NB:
        scale_sp = jnp.pad(scale_sp, ((0, NB_pad - NB), (0, 0)))
        bias_f32 = jnp.pad(bias_f32, ((0, NB_pad - NB), (0, 0)))

    # bf16 MXU inputs (f32 accumulation inside the kernel).  NOTE: deliberate
    # precision trade vs. the f32 PyTorch reference (self-test compensates).
    u_bf = u.astype(jnp.bfloat16)                                     # (N, D)
    vt_bf = v.astype(jnp.bfloat16).T                                  # (D, F), F on lanes
    b_col = b.astype(jnp.int32).reshape(N, 1)                         # (N, 1)

    # Tile sizes clipped to the (8,128)-rounded problem size.  out_shape is the
    # exact (N, F); Pallas masks edge-block stores, so no pad / post-slice copy.
    tn_eff = min(tn, _round_up(N, 8))
    tf_eff = min(tf, _round_up(F, 128))
    n_tiles = pl.cdiv(N, tn_eff)
    f_tiles = pl.cdiv(F, tf_eff)

    # Grid order: feature axis outer (v/scale/bias tiles resident across the row
    # sweep) unless it has a single tile -> row axis outer so both v7x cores work.
    feat_outer = (f_tiles > 1) or (n_tiles == 1)
    if feat_outer:
        grid = (f_tiles, n_tiles)
        as_grid = lambda f: (lambda j, i: f(i, j))
    else:
        grid = (n_tiles, f_tiles)
        as_grid = lambda f: (lambda i, j: f(i, j))

    compiler_kwargs = {"dimension_semantics": ("parallel", "parallel")}
    vmem_est = _vmem_estimate_bytes(tn_eff, tf_eff, D, NB_pad,
                                    jnp.dtype(out_dtype).itemsize)
    if vmem_est > 12 * 1024 * 1024:
        # Above the most conservative scoped default (v5e 16 MiB); leave margin,
        # cap below v7x's 64 MiB physical per-core VMEM.
        compiler_kwargs["vmem_limit_bytes"] = int(min(2 * vmem_est, 56 * 1024 * 1024))

    logits = pl.pallas_call(
        _ber_decoder_kernel,
        out_shape=jax.ShapeDtypeStruct((N, F), out_dtype),
        grid=grid,
        in_specs=[
            pl.BlockSpec((tn_eff, D), as_grid(lambda i, j: (i, 0))),
            pl.BlockSpec((D, tf_eff), as_grid(lambda i, j: (0, j))),
            pl.BlockSpec((tn_eff, 1), as_grid(lambda i, j: (i, 0))),
            pl.BlockSpec((NB_pad, tf_eff), as_grid(lambda i, j: (0, j))),
            pl.BlockSpec((NB_pad, tf_eff), as_grid(lambda i, j: (0, j))),
        ],
        out_specs=pl.BlockSpec((tn_eff, tf_eff), as_grid(lambda i, j: (i, j))),
        compiler_params=pltpu.CompilerParams(**compiler_kwargs),
    )(u_bf, vt_bf, b_col, scale_sp, bias_f32)

    adj_rec = None
    # TODO(synk): torch.distributions.Bernoulli(logits=...) is a zero-compute
    # parameter wrapper; we return the logits (probs = sigmoid(logits)).
    return logits, adj_rec


def xavier_uniform(key, shape):
    # torch.nn.init.xavier_uniform_ for a 2-D tensor: fan_out=shape[0], fan_in=shape[1]
    fan_out, fan_in = shape
    bound = (6.0 / (fan_in + fan_out)) ** 0.5
    return jax.random.uniform(key, shape, jnp.float32, -bound, bound)


if __name__ == "__main__":
    key = jax.random.PRNGKey(0)
    k_scale, k_bias, k_u, k_v, k_b = jax.random.split(key, 5)

    # small shapes consistent with the module
    N = 16            # number of "u" rows
    D = 32            # latent dim
    n_features = 256  # F == number of v rows / columns of logits
    n_batches = 3

    scale_lin = xavier_uniform(k_scale, (n_batches, n_features))
    bias = xavier_uniform(k_bias, (n_batches, n_features))

    u = jax.random.normal(k_u, (N, D), jnp.float32)
    v = jax.random.normal(k_v, (n_features, D), jnp.float32)
    b = jax.random.randint(k_b, (N,), 0, n_batches, jnp.int32)
    l = jnp.ones((N, 1), jnp.float32)  # unused, as in the PyTorch forward

    logits, adj_rec = ber_data_decoder_forward(u, v, b, l, scale_lin, bias)
    logits = jax.block_until_ready(logits)

    # Reference (same bf16-rounded u/v as the kernel's MXU inputs, f32 math).
    # Tolerance accounts for the bf16 output store + MXU-gathered scale/bias.
    u_bf = u.astype(jnp.bfloat16).astype(jnp.float32)
    v_bf = v.astype(jnp.bfloat16).astype(jnp.float32)
    ref = jax.nn.softplus(scale_lin[b]) * (u_bf @ v_bf.T) + bias[b]
    assert logits.shape == (N, n_features)
    assert logits.dtype == jnp.bfloat16
    assert jnp.allclose(logits.astype(jnp.float32), ref, atol=1e-1, rtol=2e-2)
    assert adj_rec is None

    print("KERNEL_OK")
</pallas_src>

<mosaic_0001>
module attributes {stable_mosaic.version = 11 : i64} {
  func.func @_ber_decoder_kernel(%arg0: i32, %arg1: i32, %arg2: memref<16x32xbf16, #tpu.memory_space<vmem>>, %arg3: memref<32x256xbf16, #tpu.memory_space<vmem>>, %arg4: memref<16x1xi32, #tpu.memory_space<vmem>>, %arg5: memref<8x256xf32, #tpu.memory_space<vmem>>, %arg6: memref<8x256xf32, #tpu.memory_space<vmem>>, %arg7: memref<16x256xbf16, #tpu.memory_space<vmem>>) attributes {dimension_semantics = [#tpu.dimension_semantics<parallel>, #tpu.dimension_semantics<parallel>], iteration_bounds = array<i64: 1, 1>, scalar_prefetch = 0 : i64, scratch_operands = 0 : i64, tpu.core_type = #tpu.core_type<tc>, window_params = [{transform_indices = @transform_0, window_bounds = array<i64: 16, 32>}, {transform_indices = @transform_1, window_bounds = array<i64: 32, 256>}, {transform_indices = @transform_2, window_bounds = array<i64: 16, 1>}, {transform_indices = @transform_3, window_bounds = array<i64: 8, 256>}, {transform_indices = @transform_4, window_bounds = array<i64: 8, 256>}, {transform_indices = @transform_5, window_bounds = array<i64: 16, 256>}]} {
    %c0 = arith.constant 0 : index
    %c0_0 = arith.constant 0 : index
    %0 = vector.load %arg2[%c0, %c0_0] : memref<16x32xbf16, #tpu.memory_space<vmem>>, vector<16x32xbf16>
    %c0_1 = arith.constant 0 : index
    %c0_2 = arith.constant 0 : index
    %1 = vector.load %arg3[%c0_1, %c0_2] : memref<32x256xbf16, #tpu.memory_space<vmem>>, vector<32x256xbf16>
    %cst = arith.constant dense<0.000000e+00> : vector<16x256xf32>
    %2 = tpu.matmul %0, %1, %cst {dimension_numbers = #tpu.dot_dimension_numbers<[1], [0], [0], [1], [0, 0, 1, 1], [], []>} : vector<16x32xbf16>, vector<32x256xbf16>, vector<16x256xf32> -> vector<16x256xf32>
    %c0_3 = arith.constant 0 : index
    %c0_4 = arith.constant 0 : index
    %3 = vector.load %arg4[%c0_3, %c0_4] : memref<16x1xi32, #tpu.memory_space<vmem>>, vector<16x1xi32>
    %4 = tpu.iota {dimensions = array<i32: 1>} : vector<16x8xi32>
    %5 = vector.broadcast %3 : vector<16x1xi32> to vector<16x8xi32>
    %6 = arith.cmpi eq, %5, %4 : vector<16x8xi32>
    %7 = arith.extui %6 : vector<16x8xi1> to vector<16x8xi32>
    %8 = arith.sitofp %7 : vector<16x8xi32> to vector<16x8xf32>
    %c0_5 = arith.constant 0 : index
    %c0_6 = arith.constant 0 : index
    %9 = vector.load %arg5[%c0_5, %c0_6] : memref<8x256xf32, #tpu.memory_space<vmem>>, vector<8x256xf32>
    %cst_7 = arith.constant dense<0.000000e+00> : vector<16x256xf32>
    %10 = tpu.matmul %8, %9, %cst_7 {dimension_numbers = #tpu.dot_dimension_numbers<[1], [0], [0], [1], [0, 0, 1, 1], [], []>} : vector<16x8xf32>, vector<8x256xf32>, vector<16x256xf32> -> vector<16x256xf32>
    %c0_8 = arith.constant 0 : index
    %c0_9 = arith.constant 0 : index
    %11 = vector.load %arg6[%c0_8, %c0_9] : memref<8x256xf32, #tpu.memory_space<vmem>>, vector<8x256xf32>
    %cst_10 = arith.constant dense<0.000000e+00> : vector<16x256xf32>
    %12 = tpu.matmul %8, %11, %cst_10 {dimension_numbers = #tpu.dot_dimension_numbers<[1], [0], [0], [1], [0, 0, 1, 1], [], []>} : vector<16x8xf32>, vector<8x256xf32>, vector<16x256xf32> -> vector<16x256xf32>
    %13 = arith.mulf %10, %2 : vector<16x256xf32>
    %14 = arith.addf %13, %12 : vector<16x256xf32>
    %15 = arith.truncf %14 : vector<16x256xf32> to vector<16x256xbf16>
    %c0_11 = arith.constant 0 : index
    %c0_12 = arith.constant 0 : index
    %16 = vector.load %arg7[%c0_11, %c0_12] : memref<16x256xbf16, #tpu.memory_space<vmem>>, vector<16x256xbf16>
    tpu.vector_store %arg7[%c0_11, %c0_12], %15 {strides = array<i32>} : memref<16x256xbf16, #tpu.memory_space<vmem>>, vector<16x256xbf16>,
    return
  }
  func.func @transform_0(%arg0: i32, %arg1: i32) -> (i32, i32) {
    %c0_i32 = arith.constant 0 : i32
    %c0_i32_0 = arith.constant 0 : i32
    return %arg1, %c0_i32 : i32, i32
  }
  func.func @transform_1(%arg0: i32, %arg1: i32) -> (i32, i32) {
    %c0_i32 = arith.constant 0 : i32
    %c0_i32_0 = arith.constant 0 : i32
    return %c0_i32, %arg0 : i32, i32
  }
  func.func @transform_2(%arg0: i32, %arg1: i32) -> (i32, i32) {
    %c0_i32 = arith.constant 0 : i32
    %c0_i32_0 = arith.constant 0 : i32
    return %arg1, %c0_i32 : i32, i32
  }
  func.func @transform_3(%arg0: i32, %arg1: i32) -> (i32, i32) {
    %c0_i32 = arith.constant 0 : i32
    %c0_i32_0 = arith.constant 0 : i32
    return %c0_i32, %arg0 : i32, i32
  }
  func.func @transform_4(%arg0: i32, %arg1: i32) -> (i32, i32) {
    %c0_i32 = arith.constant 0 : i32
    %c0_i32_0 = arith.constant 0 : i32
    return %c0_i32, %arg0 : i32, i32
  }
  func.func @transform_5(%arg0: i32, %arg1: i32) -> (i32, i32) {
    %c0_i32 = arith.constant 0 : i32
    return %arg1, %arg0 : i32, i32
  }
}

</mosaic_0001>

<llo_original>
// kernel: tpu_custom_call.1
$region0: #{tpu_custom_call.1}
  #allocation0 [shape = 'u32[]', space=smem, size = 0x4, offset = 0x4, fixed_abs, tag = 'smem constant byte address 0x4 - core index']
  #allocation1 [shape = 'u32[144,128]{1,0:T(1,128)}', space=vmem, size = 0x12000, scoped, tag = 'internal scratch']
  %s0 = inlined_call_operand.hbm [shape: bf16[16,32], index: 0, kind: input, shape index: {}]
  %s1 = inlined_call_operand.hbm [shape: bf16[32,256], index: 1, kind: input, shape index: {}]
  %s2 = inlined_call_operand.vmem [shape: s32[16,1], index: 2, kind: input, shape index: {}]
  %s3 = inlined_call_operand.vmem [shape: f32[8,256], index: 3, kind: input, shape index: {}]
  %s4 = inlined_call_operand.vmem [shape: f32[8,256], index: 4, kind: input, shape index: {}]
  %s5 = inlined_call_operand.hbm [shape: bf16[16,256], index: 5, kind: output, shape index: {}]
  %s6 = sld [smem:[#allocation0]]
  $region38: #{tpu_custom_call.1} parent=0
    _
  %s8 = ssub.s32 1, %s6
  %s9 = scalar_select 0, %s8, %s6
  $region1: #{tpu_custom_call.1} parent=0
    #allocation2 [shape = 'u8[4096]{0}', space=vmem, size = 0x1000, scoped, tag = 'input window, operand 0, single buffered']
    #allocation3 [shape = 's32[1]{0}', space=sflag, size = 0x4, scoped, tag = 'scoped memory for tpu_custom_call.1']
    #allocation4 [shape = 's32[1]{0}', space=sflag, size = 0x4, scoped, tag = 'scoped memory for tpu_custom_call.1']
    #allocation5 [shape = 'u8[16384]{0}', space=vmem, size = 0x4000, scoped, tag = 'input window, operand 1, single buffered']
    #allocation6 [shape = 's32[1]{0}', space=sflag, size = 0x4, scoped, tag = 'scoped memory for tpu_custom_call.1']
    #allocation7 [shape = 'u8[8192]{0}', space=vmem, size = 0x2000, scoped, tag = 'output window, operand 0, single buffered']
    %10 = vsyncpa [#allocation3], 0
    %11 = vsyncpa [#allocation6], 0
    %12 = vsyncpa [#allocation4], 0
    // Predicated region
    $region2: #{tpu_custom_call.1} parent=1 // pred_check
      _
    $region3: #{tpu_custom_call.1} parent=1 // pred_check_branch
      %14 = sbr.rel (0) target = $region5
    $region4: #{tpu_custom_call.1} parent=1 // pred_region
      %s16 = ssub.s32 128, 128
      %17 = vsyncadd [#allocation3], %s16
      %s18 = sshll.u32 [#allocation2], 4
      %s19 = int_to_ptr.vmem [resolvable:$true] %s18
      %24 = dma.hbm_to_vmem [thread:$0]  %s0, 128, %s19, [#allocation3], 64, 64, 4
    $region5: #{tpu_custom_call.1} parent=1 // pred_fallthru
      _
    // Predicated region
    $region6: #{tpu_custom_call.1} parent=1 // pred_check
      _
    $region7: #{tpu_custom_call.1} parent=1 // pred_check_branch
      %26 = sbr.rel (0) target = $region9
    $region8: #{tpu_custom_call.1} parent=1 // pred_region
      %s28 = ssub.s32 512, 512
      %29 = vsyncadd [#allocation6], %s28
      %s30 = sshll.u32 [#allocation5], 4
      %s31 = int_to_ptr.vmem [resolvable:$true] %s30
      %36 = dma.hbm_to_vmem [thread:$0]  %s1, 512, %s31, [#allocation6], 128, 128, 8
    $region9: #{tpu_custom_call.1} parent=1 // pred_fallthru
      _
    // Predicated region
    $region10: #{tpu_custom_call.1} parent=1 // pred_check
      _
    $region11: #{tpu_custom_call.1} parent=1 // pred_check_branch
      %38 = sbr.rel (0) target = $region13
    $region12: #{tpu_custom_call.1} parent=1 // pred_region
      _
    $region13: #{tpu_custom_call.1} parent=1 // pred_fallthru
      _
    // Predicated region
    $region14: #{tpu_custom_call.1} parent=1 // pred_check
      _
    $region15: #{tpu_custom_call.1} parent=1 // pred_check_branch
      %40 = sbr.rel (0) target = $region17
    $region16: #{tpu_custom_call.1} parent=1 // pred_region
      _
    $region17: #{tpu_custom_call.1} parent=1 // pred_fallthru
      _
    // Predicated region
    $region18: #{tpu_custom_call.1} parent=1 // pred_check
      _
    $region19: #{tpu_custom_call.1} parent=1 // pred_check_branch
      %42 = sbr.rel (0) target = $region21
    $region20: #{tpu_custom_call.1} parent=1 // pred_region
      _
    $region21: #{tpu_custom_call.1} parent=1 // pred_fallthru
      _
    // Predicated region
    $region22: #{tpu_custom_call.1} parent=1 // pred_check
      _
    $region23: #{tpu_custom_call.1} parent=1 // pred_check_branch
      %44 = sbr.rel (0) target = $region25
    $region24: #{tpu_custom_call.1} parent=1 // pred_region
      %45 = dma.done [#allocation3], 128
    $region25: #{tpu_custom_call.1} parent=1 // pred_fallthru
      _
    // Predicated region
    $region26: #{tpu_custom_call.1} parent=1 // pred_check
      _
    $region27: #{tpu_custom_call.1} parent=1 // pred_check_branch
      %47 = sbr.rel (0) target = $region29
    $region28: #{tpu_custom_call.1} parent=1 // pred_region
      %48 = dma.done [#allocation6], 512
    $region29: #{tpu_custom_call.1} parent=1 // pred_fallthru
      _
    %v50 = vld [vmem:[#allocation2] sm:$0xf]
    %v51 = vld [vmem:[#allocation2 + $0x4] sm:$0xf]
    %v52 = vld [vmem:[#allocation5] sm:$0xff]
    %v53 = vld [vmem:[#allocation5 + $0x8] sm:$0xff]
    %v54 = vld [vmem:[#allocation5 + $0x10] sm:$0xff]
    %v55 = vld [vmem:[#allocation5 + $0x18] sm:$0xff]
    %v58 = vunpack.c.l.b16 %v50
    %v59 = vunpack.c.l.b16 %v51
    %v60 = vpack.c.b16 %v59, %v58
    %v65 = vunpack.c.l.b16 %v52
    %v66 = vunpack.c.h.b16 %v52
    %v67 = vunpack.c.l.b16 %v53
    %v68 = vunpack.c.h.b16 %v53
    %v69 = vunpack.c.l.b16 %v54
    %v70 = vunpack.c.h.b16 %v54
    %v71 = vunpack.c.l.b16 %v55
    %v72 = vunpack.c.h.b16 %v55
    %v73 = vpack.c.b16 %v67, %v65
    %v74 = vpack.c.b16 %v68, %v66
    %v75 = vpack.c.b16 %v71, %v69
    %v76 = vpack.c.b16 %v72, %v70
    %vm81 = vcmask 261120
    %v83 = vsel %vm81, %v60, 0
    %85 = vmatprep.subr.bf16.mxu0 %v74
    %86 = vmatpush1.bf16.msra.mxu0 %v73
    %87 = vmatprep.subr.bf16.mxu0 %v76
    %88 = vmatpush1.bf16.msra.mxu0 %v75
    %89 = vmatprep.subr.bf16.mxu0 0
    %90 = vmatpush1.bf16.msra.mxu0 0
    %91 = vmatprep.subr.bf16.mxu0 0
    %92 = vmatpush1.bf16.msra.mxu0 0
    %93 = vmatprep.subr.bf16.mxu0 0
    %94 = vmatpush1.bf16.msra.mxu0 0
    %95 = vmatprep.subr.bf16.mxu0 0
    %96 = vmatpush1.bf16.msra.mxu0 0
    %97 = vmatprep.subr.bf16.mxu0 0
    %98 = vmatpush1.bf16.msra.mxu0 0
    %99 = vmatprep.subr.bf16.mxu0 0
    %100 = vmatpush1.bf16.msra.mxu0 0
    %101 = vmatprep.subr.bf16.mxu0 0
    %102 = vmatpush1.bf16.msra.mxu0 0
    %103 = vmatprep.subr.bf16.mxu0 0
    %104 = vmatpush1.bf16.msra.mxu0 0
    %105 = vmatprep.subr.bf16.mxu0 0
    %106 = vmatpush1.bf16.msra.mxu0 0
    %107 = vmatprep.subr.bf16.mxu0 0
    %108 = vmatpush1.bf16.msra.mxu0 0
    %109 = vmatprep.subr.bf16.mxu0 0
    %110 = vmatpush1.bf16.msra.mxu0 0
    %111 = vmatprep.subr.bf16.mxu0 0
    %112 = vmatpush1.bf16.msra.mxu0 0
    %113 = vmatprep.subr.bf16.mxu0 0
    %114 = vmatpush1.bf16.msra.mxu0 0
    %115 = vmatprep.subr.bf16.mxu0 0
    %116 = vmatpush1.bf16.msra.mxu0 0
    %117 = vmatprep.mubr.bf16.mxu0 0
    %118 = vmatmul.mubr.bf16.gmra.mrb[0].mxu0 %v83
    %v119 = vpop.f32.mrb[0].mxu0
    %v120 = vadd.f32 0.0, %v119
    %v121 = vpop.f32.mrb[0].mxu0
    %v122 = vadd.f32 0.0, %v121
    %v123 = vpop.f32.mrb[0].mxu0
    %v124 = vadd.f32 0.0, %v123
    %v125 = vpop.f32.mrb[0].mxu0
    %v126 = vadd.f32 0.0, %v125
    %127 = vdwg.mxu0
    %v128 = vld [vmem:[%s2] sm:$0xff]
    %v129 = vld [vmem:[%s2 + $0x8] sm:$0xff]
    %v130 = vlaneseq
    %v131 = vand.u32 %v130, 127
    %132 = vset.pattern.permute.xlu0 0
    %133 = vperm.xlu0 %132, %v128
    %v134 = vpop.permute.xlu0 %133
    %135 = vset.pattern.permute.xlu0 0
    %136 = vperm.xlu0 %135, %v129
    %v137 = vpop.permute.xlu0 %136
    %vm138 = vcmp.eq.s32.totalorder %v134, %v131
    %vm139 = vcmp.eq.s32.totalorder %v137, %v131
    %v140 = vsel %vm138, 1, 0
    %v141 = vsel %vm139, 1, 0
    %v142 = vcvt.s32.f32 %v140
    %v143 = vcvt.s32.f32 %v141
    %v144 = vld [vmem:[%s3] sm:$0xff]
    %v145 = vld [vmem:[%s3 + $0x8] sm:$0xff]
    %vm146 = vcmask 64512
    %v148 = vsel %vm146, %v142, 0
    %v151 = vsel %vm146, %v143, 0
    %153 = vmatprep.subr.mxu0 %v145
    %154 = vmatpush1.msra.mxu0 %v144
    %155 = vmatprep.subr.mxu0 0.0
    %156 = vmatpush1.msra.mxu0 0.0
    %157 = vmatprep.subr.mxu0 0.0
    %158 = vmatpush1.msra.mxu0 0.0
    %159 = vmatprep.subr.mxu0 0.0
    %160 = vmatpush1.msra.mxu0 0.0
    %161 = vmatprep.subr.mxu0 0.0
    %162 = vmatpush1.msra.mxu0 0.0
    %163 = vmatprep.subr.mxu0 0.0
    %164 = vmatpush1.msra.mxu0 0.0
    %165 = vmatprep.subr.mxu0 0.0
    %166 = vmatpush1.msra.mxu0 0.0
    %167 = vmatprep.subr.mxu0 0.0
    %168 = vmatpush1.msra.mxu0 0.0
    %169 = vmatprep.subr.mxu0 0.0
    %170 = vmatpush1.msra.mxu0 0.0
    %171 = vmatprep.subr.mxu0 0.0
    %172 = vmatpush1.msra.mxu0 0.0
    %173 = vmatprep.subr.mxu0 0.0
    %174 = vmatpush1.msra.mxu0 0.0
    %175 = vmatprep.subr.mxu0 0.0
    %176 = vmatpush1.msra.mxu0 0.0
    %177 = vmatprep.subr.mxu0 0.0
    %178 = vmatpush1.msra.mxu0 0.0
    %179 = vmatprep.subr.mxu0 0.0
    %180 = vmatpush1.msra.mxu0 0.0
    %181 = vmatprep.subr.mxu0 0.0
    %182 = vmatpush1.msra.mxu0 0.0
    %183 = vmatprep.subr.mxu0 0.0
    %184 = vmatpush1.msra.mxu0 0.0
    %185 = vmatprep.subr.mxu0 0.0
    %186 = vmatpush1.msra.mxu0 0.0
    %187 = vmatprep.subr.mxu0 0.0
    %188 = vmatpush1.msra.mxu0 0.0
    %189 = vmatprep.subr.mxu0 0.0
    %190 = vmatpush1.msra.mxu0 0.0
    %191 = vmatprep.subr.mxu0 0.0
    %192 = vmatpush1.msra.mxu0 0.0
    %193 = vmatprep.subr.mxu0 0.0
    %194 = vmatpush1.msra.mxu0 0.0
    %195 = vmatprep.subr.mxu0 0.0
    %196 = vmatpush1.msra.mxu0 0.0
    %197 = vmatprep.subr.mxu0 0.0
    %198 = vmatpush1.msra.mxu0 0.0
    %199 = vmatprep.subr.mxu0 0.0
    %200 = vmatpush1.msra.mxu0 0.0
    %201 = vmatprep.subr.mxu0 0.0
    %202 = vmatpush1.msra.mxu0 0.0
    %203 = vmatprep.subr.mxu0 0.0
    %204 = vmatpush1.msra.mxu0 0.0
    %205 = vmatprep.subr.mxu0 0.0
    %206 = vmatpush1.msra.mxu0 0.0
    %207 = vmatprep.subr.mxu0 0.0
    %208 = vmatpush1.msra.mxu0 0.0
    %209 = vmatprep.subr.mxu0 0.0
    %210 = vmatpush1.msra.mxu0 0.0
    %211 = vmatprep.subr.mxu0 0.0
    %212 = vmatpush1.msra.mxu0 0.0
    %213 = vmatprep.subr.mxu0 0.0
    %214 = vmatpush1.msra.mxu0 0.0
    %215 = vmatprep.subr.mxu0 0.0
    %216 = vmatpush1.msra.mxu0 0.0
    %217 = vmatprep.mubr.f32.mxu0 0.0
    %218 = vmatmul.mubr.f32.gmra.mrb[0].mxu0 %v148
    %v219 = vpop.f32.mrb[0].mxu0
    %v220 = vadd.f32 0.0, %v219
    %v221 = vpop.f32.mrb[0].mxu0
    %v222 = vadd.f32 0.0, %v221
    %223 = vmatprep.mubr.f32.mxu0 0.0
    %224 = vmatmul.mubr.f32.gmra.mrb[0].mxu0 %v151
    %v225 = vpop.f32.mrb[0].mxu0
    %v226 = vadd.f32 0.0, %v225
    %v227 = vpop.f32.mrb[0].mxu0
    %v228 = vadd.f32 0.0, %v227
    %229 = vdwg.mxu0
    %v230 = vld [vmem:[%s4] sm:$0xff]
    %v231 = vld [vmem:[%s4 + $0x8] sm:$0xff]
    %232 = vmatprep.subr.mxu0 %v231
    %233 = vmatpush1.msra.mxu0 %v230
    %234 = vmatprep.subr.mxu0 0.0
    %235 = vmatpush1.msra.mxu0 0.0
    %236 = vmatprep.subr.mxu0 0.0
    %237 = vmatpush1.msra.mxu0 0.0
    %238 = vmatprep.subr.mxu0 0.0
    %239 = vmatpush1.msra.mxu0 0.0
    %240 = vmatprep.subr.mxu0 0.0
    %241 = vmatpush1.msra.mxu0 0.0
    %242 = vmatprep.subr.mxu0 0.0
    %243 = vmatpush1.msra.mxu0 0.0
    %244 = vmatprep.subr.mxu0 0.0
    %245 = vmatpush1.msra.mxu0 0.0
    %246 = vmatprep.subr.mxu0 0.0
    %247 = vmatpush1.msra.mxu0 0.0
    %248 = vmatprep.subr.mxu0 0.0
    %249 = vmatpush1.msra.mxu0 0.0
    %250 = vmatprep.subr.mxu0 0.0
    %251 = vmatpush1.msra.mxu0 0.0
    %252 = vmatprep.subr.mxu0 0.0
    %253 = vmatpush1.msra.mxu0 0.0
    %254 = vmatprep.subr.mxu0 0.0
    %255 = vmatpush1.msra.mxu0 0.0
    %256 = vmatprep.subr.mxu0 0.0
    %257 = vmatpush1.msra.mxu0 0.0
    %258 = vmatprep.subr.mxu0 0.0
    %259 = vmatpush1.msra.mxu0 0.0
    %260 = vmatprep.subr.mxu0 0.0
    %261 = vmatpush1.msra.mxu0 0.0
    %262 = vmatprep.subr.mxu0 0.0
    %263 = vmatpush1.msra.mxu0 0.0
    %264 = vmatprep.subr.mxu0 0.0
    %265 = vmatpush1.msra.mxu0 0.0
    %266 = vmatprep.subr.mxu0 0.0
    %267 = vmatpush1.msra.mxu0 0.0
    %268 = vmatprep.subr.mxu0 0.0
    %269 = vmatpush1.msra.mxu0 0.0
    %270 = vmatprep.subr.mxu0 0.0
    %271 = vmatpush1.msra.mxu0 0.0
    %272 = vmatprep.subr.mxu0 0.0
    %273 = vmatpush1.msra.mxu0 0.0
    %274 = vmatprep.subr.mxu0 0.0
    %275 = vmatpush1.msra.mxu0 0.0
    %276 = vmatprep.subr.mxu0 0.0
    %277 = vmatpush1.msra.mxu0 0.0
    %278 = vmatprep.subr.mxu0 0.0
    %279 = vmatpush1.msra.mxu0 0.0
    %280 = vmatprep.subr.mxu0 0.0
    %281 = vmatpush1.msra.mxu0 0.0
    %282 = vmatprep.subr.mxu0 0.0
    %283 = vmatpush1.msra.mxu0 0.0
    %284 = vmatprep.subr.mxu0 0.0
    %285 = vmatpush1.msra.mxu0 0.0
    %286 = vmatprep.subr.mxu0 0.0
    %287 = vmatpush1.msra.mxu0 0.0
    %288 = vmatprep.subr.mxu0 0.0
    %289 = vmatpush1.msra.mxu0 0.0
    %290 = vmatprep.subr.mxu0 0.0
    %291 = vmatpush1.msra.mxu0 0.0
    %292 = vmatprep.subr.mxu0 0.0
    %293 = vmatpush1.msra.mxu0 0.0
    %294 = vmatprep.subr.mxu0 0.0
    %295 = vmatpush1.msra.mxu0 0.0
    %296 = vmatprep.mubr.f32.mxu0 0.0
    %297 = vmatmul.mubr.f32.gmra.mrb[0].mxu0 %v148
    %v298 = vpop.f32.mrb[0].mxu0
    %v299 = vadd.f32 0.0, %v298
    %v300 = vpop.f32.mrb[0].mxu0
    %v301 = vadd.f32 0.0, %v300
    %302 = vmatprep.mubr.f32.mxu0 0.0
    %303 = vmatmul.mubr.f32.gmra.mrb[0].mxu0 %v151
    %v304 = vpop.f32.mrb[0].mxu0
    %v305 = vadd.f32 0.0, %v304
    %v306 = vpop.f32.mrb[0].mxu0
    %v307 = vadd.f32 0.0, %v306
    %308 = vdwg.mxu0
    %v309 = vmul.f32 %v220, %v120
    %v310 = vmul.f32 %v222, %v122
    %v311 = vmul.f32 %v226, %v124
    %v312 = vmul.f32 %v228, %v126
    %v313 = vadd.f32 %v309, %v299
    %v314 = vadd.f32 %v310, %v301
    %v315 = vadd.f32 %v311, %v305
    %v316 = vadd.f32 %v312, %v307
    %v317 = vpack.c.bf16 %v315, %v313
    %v318 = vpack.c.bf16 %v316, %v314
    %v321 = vunpack.c.l.b16 %v317
    %v322 = vunpack.c.l.b16 %v318
    %v323 = vunpack.c.h.b16 %v317
    %v324 = vunpack.c.h.b16 %v318
    %v325 = vpack.c.b16 %v322, %v321
    %v326 = vpack.c.b16 %v324, %v323
    %329 = vst [vmem:[#allocation7] sm:$0xff] %v325
    %330 = vst [vmem:[#allocation7 + $0x8] sm:$0xff] %v326
    // Predicated region
    $region30: #{tpu_custom_call.1} parent=1 // pred_check
      _
    $region31: #{tpu_custom_call.1} parent=1 // pred_check_branch
      %332 = sbr.rel (0) target = $region33
    $region32: #{tpu_custom_call.1} parent=1 // pred_region
      %s334 = ssub.s32 256, 256
      %335 = vsyncadd [#allocation4], %s334
      %s336 = sshll.u32 [#allocation7], 4
      %s337 = int_to_ptr.vmem [resolvable:$true] %s336
      %342 = dma.vmem_to_hbm [thread:$0]  %s337, 256, %s5, [#allocation4], 128, 128, 8
    $region33: #{tpu_custom_call.1} parent=1 // pred_fallthru
      _
    // Predicated region
    $region34: #{tpu_custom_call.1} parent=1 // pred_check
      _
    $region35: #{tpu_custom_call.1} parent=1 // pred_check_branch
      %344 = sbr.rel (0) target = $region37
    $region36: #{tpu_custom_call.1} parent=1 // pred_region
      %345 = dma.done [#allocation4], 256
    $region37: #{tpu_custom_call.1} parent=1 // pred_fallthru
      _
    %346 = vsyncpa [#allocation3], 1
    %347 = vsyncpa [#allocation6], 1
    %348 = vsyncpa [#allocation4], 1

</llo_original>
